<compile_context>
chip_gen: v6e
topology: v6e:2x2x1
jax: 0.10.0
libtpu: 0.0.40
codegen_flags: <defaults>
</compile_context>

<pallas_src>
import jax
import jax.numpy as jnp
from jax import lax
from jax.experimental import pallas as pl
from jax.experimental.pallas import tpu as pltpu


def _round_up(x, m):
    return ((x + m - 1) // m) * m


def _bce_dice_stats_kernel(logits_ref, labels_ref, out_ref,
                           acc_ce, acc_inter, acc_psum, acc_tsum):
    t = pl.program_id(1)

    @pl.when(t == 0)
    def _():
        acc_ce[...] = jnp.zeros_like(acc_ce)
        acc_inter[...] = jnp.zeros_like(acc_inter)
        acc_psum[...] = jnp.zeros_like(acc_psum)
        acc_tsum[...] = jnp.zeros_like(acc_tsum)

    logits = logits_ref[...].astype(jnp.float32)        # (C, TILE) classes on sublanes
    labels = labels_ref[...]                            # (1, TILE) int32 (-1 = padded column)
    c, tile = logits.shape

    valid = (labels >= 0).astype(jnp.float32)           # (1, TILE) padded-column mask
    class_ids = lax.broadcasted_iota(jnp.int32, (c, tile), 0)
    onehot = (class_ids == labels).astype(jnp.float32)  # (C, TILE); all-zero on padded columns

    # numerically-stable softmax / logsumexp over the class (sublane) axis
    m = jnp.max(logits, axis=0, keepdims=True)          # (1, TILE)
    e = jnp.exp(logits - m)                             # (C, TILE)   EUP
    denom = jnp.sum(e, axis=0, keepdims=True)           # (1, TILE)
    probs = e * pl.reciprocal(denom, approx=True)       # softmax(pred, dim=1)  (EUP recip)
    lse = jnp.log(denom) + m                            # (1, TILE)

    # pure elementwise accumulation into lane-wide accumulators (no per-tile reductions)
    acc_ce[...] += onehot * (lse - logits)              # -log_softmax at label (0 on pads)
    acc_inter[...] += probs * onehot                    # intersection per class
    acc_psum[...] += probs * valid                      # softmax prob sum per class (mask pads)
    acc_tsum[...] += onehot                             # one-hot target sum per class

    @pl.when(t == pl.num_programs(1) - 1)
    def _():
        # single lane reduction per batch element; out_ref is (C, 4)
        out_ref[:, 0:1] = jnp.sum(acc_ce[...], axis=-1, keepdims=True)
        out_ref[:, 1:2] = jnp.sum(acc_inter[...], axis=-1, keepdims=True)
        out_ref[:, 2:3] = jnp.sum(acc_psum[...], axis=-1, keepdims=True)
        out_ref[:, 3:4] = jnp.sum(acc_tsum[...], axis=-1, keepdims=True)


def bce_dice_loss(pred, mask, n_classes, multiclass=False, epsilon=1e-6, max_tile=32768):
    """pred: (B, C, H, W) float logits; mask: (B, K, H, W) int labels (uses mask[:, -1])."""
    B, C, H, W = pred.shape
    assert C == n_classes
    hw = H * W
    n = B * hw

    # Free reshapes only (NCHW contiguity preserved; no HBM transpose copy).
    logits = pred.reshape(B, C, hw)
    labels = mask[:, -1, :, :].reshape(B, 1, hw).astype(jnp.int32)

    # Lane tile: multiple of 128, large (up to max_tile) so per-step pipeline overhead
    # is amortized; VMEM use stays ~a few MiB even under v7x's smaller VMEM.
    tile = min(max_tile, _round_up(hw, 128))
    hw_pad = _round_up(hw, tile)
    if hw_pad != hw:
        logits = jnp.pad(logits, ((0, 0), (0, 0), (0, hw_pad - hw)))
        labels = jnp.pad(labels, ((0, 0), (0, 0), (0, hw_pad - hw)), constant_values=-1)
    n_tiles = hw_pad // tile

    stats = pl.pallas_call(
        _bce_dice_stats_kernel,
        out_shape=jax.ShapeDtypeStruct((B, C, 4), jnp.float32),
        grid_spec=pltpu.PrefetchScalarGridSpec(
            num_scalar_prefetch=0,
            grid=(B, n_tiles),
            in_specs=[
                pl.BlockSpec((None, C, tile), lambda b, t: (b, 0, t)),
                pl.BlockSpec((None, 1, tile), lambda b, t: (b, 0, t)),
            ],
            out_specs=pl.BlockSpec((None, C, 4), lambda b, t: (b, 0, 0)),
            scratch_shapes=[pltpu.VMEM((C, tile), jnp.float32)] * 4,
        ),
        compiler_params=pltpu.CompilerParams(
            dimension_semantics=("parallel", "arbitrary")),  # batch axis splits across v7x TCs
    )(logits, labels)

    ce_sum = jnp.sum(stats[:, :, 0])
    inter_c = jnp.sum(stats[:, :, 1], axis=0)   # (C,)
    psum_c = jnp.sum(stats[:, :, 2], axis=0)
    tsum_c = jnp.sum(stats[:, :, 3], axis=0)

    bce_loss = ce_sum / n                       # CrossEntropyLoss(reduction='mean')

    if multiclass:
        # multiclass_dice_coeff: per-channel dice (reduce_batch_first=True), mean over channels
        sets_sum_c = psum_c + tsum_c
        sets_sum_c = jnp.where(sets_sum_c == 0, 2.0 * inter_c, sets_sum_c)
        dice = jnp.mean((2.0 * inter_c + epsilon) / (sets_sum_c + epsilon))
    else:
        # dice_coeff(..., reduce_batch_first=True): single dice over flattened tensors
        inter = jnp.sum(inter_c)
        sets_sum = jnp.sum(psum_c) + jnp.sum(tsum_c)
        sets_sum = jnp.where(sets_sum == 0, 2.0 * inter, sets_sum)
        dice = (2.0 * inter + epsilon) / (sets_sum + epsilon)

    return bce_loss + (1.0 - dice)


def _reference_loss(pred, mask, n_classes, multiclass=False, epsilon=1e-6):
    labels = mask[:, -1, :, :]
    logp = jax.nn.log_softmax(pred, axis=1)
    ce = -jnp.mean(jnp.take_along_axis(logp, labels[:, None, :, :], axis=1))
    probs = jax.nn.softmax(pred, axis=1)
    target = jax.nn.one_hot(labels, n_classes, axis=1, dtype=jnp.float32)
    if multiclass:
        inter = jnp.sum(probs * target, axis=(0, 2, 3))
        ss = jnp.sum(probs, axis=(0, 2, 3)) + jnp.sum(target, axis=(0, 2, 3))
        ss = jnp.where(ss == 0, 2.0 * inter, ss)
        dice = jnp.mean((2.0 * inter + epsilon) / (ss + epsilon))
    else:
        inter = jnp.sum(probs * target)
        ss = jnp.sum(probs) + jnp.sum(target)
        ss = jnp.where(ss == 0, 2.0 * inter, ss)
        dice = (2.0 * inter + epsilon) / (ss + epsilon)
    return ce + (1.0 - dice)


if __name__ == "__main__":
    # BceDiceLoss(n_classes=4)
    B, C, H, W = 2, 4, 16, 16
    key = jax.random.PRNGKey(0)
    k_pred, k_mask = jax.random.split(key)
    pred = jax.random.normal(k_pred, (B, C, H, W), dtype=jnp.float32)
    mask = jax.random.randint(k_mask, (B, 1, H, W), 0, C, dtype=jnp.int32)

    loss = jax.block_until_ready(bce_dice_loss(pred, mask, n_classes=C, multiclass=False))
    ref = _reference_loss(pred, mask, n_classes=C, multiclass=False)
    assert jnp.allclose(loss, ref, rtol=1e-3, atol=1e-4), (loss, ref)

    loss_mc = jax.block_until_ready(bce_dice_loss(pred, mask, n_classes=C, multiclass=True))
    ref_mc = _reference_loss(pred, mask, n_classes=C, multiclass=True)
    assert jnp.allclose(loss_mc, ref_mc, rtol=1e-3, atol=1e-4), (loss_mc, ref_mc)

    print("KERNEL_OK")
</pallas_src>

<mosaic_0001>
module attributes {stable_mosaic.version = 11 : i64} {
  func.func @_bce_dice_stats_kernel(%arg0: i32, %arg1: i32, %arg2: memref<1x4x256xf32, #tpu.memory_space<vmem>>, %arg3: memref<1x1x256xi32, #tpu.memory_space<vmem>>, %arg4: memref<1x4x4xf32, #tpu.memory_space<vmem>>, %arg5: memref<4x256xf32, #tpu.memory_space<vmem>>, %arg6: memref<4x256xf32, #tpu.memory_space<vmem>>, %arg7: memref<4x256xf32, #tpu.memory_space<vmem>>, %arg8: memref<4x256xf32, #tpu.memory_space<vmem>>) attributes {dimension_semantics = [#tpu.dimension_semantics<parallel>, #tpu.dimension_semantics<arbitrary>], iteration_bounds = array<i64: 2, 1>, scalar_prefetch = 0 : i64, scratch_operands = 4 : i64, tpu.core_type = #tpu.core_type<tc>, window_params = [{transform_indices = @transform_0, window_bounds = array<i64: 1, 4, 256>}, {transform_indices = @transform_1, window_bounds = array<i64: 1, 1, 256>}, {transform_indices = @transform_2, window_bounds = array<i64: 1, 4, 4>}]} {
    %c0_i32 = arith.constant 0 : i32
    %0 = arith.cmpi eq, %arg1, %c0_i32 : i32
    %1 = arith.extui %0 : i1 to i32
    %c0_i32_0 = arith.constant 0 : i32
    %2 = arith.cmpi ne, %1, %c0_i32_0 : i32
    scf.if %2 {
      %cst_26 = arith.constant 0.000000e+00 : f32
      %49 = vector.broadcast %cst_26 : f32 to vector<4x256xf32>
      %c0_27 = arith.constant 0 : index
      %c0_28 = arith.constant 0 : index
      %50 = vector.load %arg5[%c0_27, %c0_28] : memref<4x256xf32, #tpu.memory_space<vmem>>, vector<4x256xf32>
      tpu.vector_store %arg5[%c0_27, %c0_28], %49 {strides = array<i32>} : memref<4x256xf32, #tpu.memory_space<vmem>>, vector<4x256xf32>,
      %cst_29 = arith.constant 0.000000e+00 : f32
      %51 = vector.broadcast %cst_29 : f32 to vector<4x256xf32>
      %c0_30 = arith.constant 0 : index
      %c0_31 = arith.constant 0 : index
      %52 = vector.load %arg6[%c0_30, %c0_31] : memref<4x256xf32, #tpu.memory_space<vmem>>, vector<4x256xf32>
      tpu.vector_store %arg6[%c0_30, %c0_31], %51 {strides = array<i32>} : memref<4x256xf32, #tpu.memory_space<vmem>>, vector<4x256xf32>,
      %cst_32 = arith.constant 0.000000e+00 : f32
      %53 = vector.broadcast %cst_32 : f32 to vector<4x256xf32>
      %c0_33 = arith.constant 0 : index
      %c0_34 = arith.constant 0 : index
      %54 = vector.load %arg7[%c0_33, %c0_34] : memref<4x256xf32, #tpu.memory_space<vmem>>, vector<4x256xf32>
      tpu.vector_store %arg7[%c0_33, %c0_34], %53 {strides = array<i32>} : memref<4x256xf32, #tpu.memory_space<vmem>>, vector<4x256xf32>,
      %cst_35 = arith.constant 0.000000e+00 : f32
      %55 = vector.broadcast %cst_35 : f32 to vector<4x256xf32>
      %c0_36 = arith.constant 0 : index
      %c0_37 = arith.constant 0 : index
      %56 = vector.load %arg8[%c0_36, %c0_37] : memref<4x256xf32, #tpu.memory_space<vmem>>, vector<4x256xf32>
      tpu.vector_store %arg8[%c0_36, %c0_37], %55 {strides = array<i32>} : memref<4x256xf32, #tpu.memory_space<vmem>>, vector<4x256xf32>,
    } else {
    }
    %c0 = arith.constant 0 : index
    %c0_1 = arith.constant 0 : index
    %c0_2 = arith.constant 0 : index
    %3 = vector.load %arg2[%c0, %c0_1, %c0_2] : memref<1x4x256xf32, #tpu.memory_space<vmem>>, vector<1x4x256xf32>
    %4 = vector.shape_cast %3 : vector<1x4x256xf32> to vector<4x256xf32>
    %c0_3 = arith.constant 0 : index
    %c0_4 = arith.constant 0 : index
    %c0_5 = arith.constant 0 : index
    %5 = vector.load %arg3[%c0_3, %c0_4, %c0_5] : memref<1x1x256xi32, #tpu.memory_space<vmem>>, vector<1x1x256xi32>
    %6 = vector.shape_cast %5 : vector<1x1x256xi32> to vector<1x256xi32>
    %c0_i32_6 = arith.constant 0 : i32
    %7 = vector.broadcast %c0_i32_6 : i32 to vector<1x256xi32>
    %8 = arith.cmpi sge, %6, %7 : vector<1x256xi32>
    %9 = arith.extui %8 : vector<1x256xi1> to vector<1x256xi32>
    %10 = arith.sitofp %9 : vector<1x256xi32> to vector<1x256xf32>
    %11 = tpu.iota {dimensions = array<i32: 0>} : vector<4x256xi32>
    %12 = vector.broadcast %6 : vector<1x256xi32> to vector<4x256xi32>
    %13 = arith.cmpi eq, %11, %12 : vector<4x256xi32>
    %14 = arith.extui %13 : vector<4x256xi1> to vector<4x256xi32>
    %15 = arith.sitofp %14 : vector<4x256xi32> to vector<4x256xf32>
    %cst = arith.constant dense<0xFF800000> : vector<256xf32>
    %16 = vector.multi_reduction <maximumf>, %4, %cst [0] : vector<4x256xf32> to vector<256xf32>
    %17 = vector.shape_cast %16 : vector<256xf32> to vector<1x256xf32>
    %18 = vector.broadcast %17 : vector<1x256xf32> to vector<4x256xf32>
    %19 = arith.subf %4, %18 : vector<4x256xf32>
    %20 = math.exp %19 : vector<4x256xf32>
    %cst_7 = arith.constant dense<0.000000e+00> : vector<256xf32>
    %21 = vector.multi_reduction <add>, %20, %cst_7 [0] : vector<4x256xf32> to vector<256xf32>
    %22 = vector.shape_cast %21 : vector<256xf32> to vector<1x256xf32>
    %23 = tpu.reciprocal %22 {approx = true} : vector<1x256xf32> -> vector<1x256xf32>
    %24 = vector.broadcast %23 : vector<1x256xf32> to vector<4x256xf32>
    %25 = arith.mulf %20, %24 : vector<4x256xf32>
    %26 = math.log %22 : vector<1x256xf32>
    %27 = arith.addf %26, %17 : vector<1x256xf32>
    %c0_8 = arith.constant 0 : index
    %c0_9 = arith.constant 0 : index
    %28 = vector.load %arg5[%c0_8, %c0_9] : memref<4x256xf32, #tpu.memory_space<vmem>>, vector<4x256xf32>
    %29 = vector.broadcast %27 : vector<1x256xf32> to vector<4x256xf32>
    %30 = arith.subf %29, %4 : vector<4x256xf32>
    %31 = arith.mulf %15, %30 : vector<4x256xf32>
    %32 = arith.addf %28, %31 : vector<4x256xf32>
    %c0_10 = arith.constant 0 : index
    %c0_11 = arith.constant 0 : index
    %33 = vector.load %arg5[%c0_10, %c0_11] : memref<4x256xf32, #tpu.memory_space<vmem>>, vector<4x256xf32>
    tpu.vector_store %arg5[%c0_10, %c0_11], %32 {strides = array<i32>} : memref<4x256xf32, #tpu.memory_space<vmem>>, vector<4x256xf32>,
    %c0_12 = arith.constant 0 : index
    %c0_13 = arith.constant 0 : index
    %34 = vector.load %arg6[%c0_12, %c0_13] : memref<4x256xf32, #tpu.memory_space<vmem>>, vector<4x256xf32>
    %35 = arith.mulf %25, %15 : vector<4x256xf32>
    %36 = arith.addf %34, %35 : vector<4x256xf32>
    %c0_14 = arith.constant 0 : index
    %c0_15 = arith.constant 0 : index
    %37 = vector.load %arg6[%c0_14, %c0_15] : memref<4x256xf32, #tpu.memory_space<vmem>>, vector<4x256xf32>
    tpu.vector_store %arg6[%c0_14, %c0_15], %36 {strides = array<i32>} : memref<4x256xf32, #tpu.memory_space<vmem>>, vector<4x256xf32>,
    %c0_16 = arith.constant 0 : index
    %c0_17 = arith.constant 0 : index
    %38 = vector.load %arg7[%c0_16, %c0_17] : memref<4x256xf32, #tpu.memory_space<vmem>>, vector<4x256xf32>
    %39 = vector.broadcast %10 : vector<1x256xf32> to vector<4x256xf32>
    %40 = arith.mulf %25, %39 : vector<4x256xf32>
    %41 = arith.addf %38, %40 : vector<4x256xf32>
    %c0_18 = arith.constant 0 : index
    %c0_19 = arith.constant 0 : index
    %42 = vector.load %arg7[%c0_18, %c0_19] : memref<4x256xf32, #tpu.memory_space<vmem>>, vector<4x256xf32>
    tpu.vector_store %arg7[%c0_18, %c0_19], %41 {strides = array<i32>} : memref<4x256xf32, #tpu.memory_space<vmem>>, vector<4x256xf32>,
    %c0_20 = arith.constant 0 : index
    %c0_21 = arith.constant 0 : index
    %43 = vector.load %arg8[%c0_20, %c0_21] : memref<4x256xf32, #tpu.memory_space<vmem>>, vector<4x256xf32>
    %44 = arith.addf %43, %15 : vector<4x256xf32>
    %c0_22 = arith.constant 0 : index
    %c0_23 = arith.constant 0 : index
    %45 = vector.load %arg8[%c0_22, %c0_23] : memref<4x256xf32, #tpu.memory_space<vmem>>, vector<4x256xf32>
    tpu.vector_store %arg8[%c0_22, %c0_23], %44 {strides = array<i32>} : memref<4x256xf32, #tpu.memory_space<vmem>>, vector<4x256xf32>,
    %c0_i32_24 = arith.constant 0 : i32
    %46 = arith.cmpi eq, %arg1, %c0_i32_24 : i32
    %47 = arith.extui %46 : i1 to i32
    %c0_i32_25 = arith.constant 0 : i32
    %48 = arith.cmpi ne, %47, %c0_i32_25 : i32
    scf.if %48 {
      %c0_26 = arith.constant 0 : index
      %c0_27 = arith.constant 0 : index
      %49 = vector.load %arg5[%c0_26, %c0_27] : memref<4x256xf32, #tpu.memory_space<vmem>>, vector<4x256xf32>
      %cst_28 = arith.constant dense<0.000000e+00> : vector<4xf32>
      %50 = vector.multi_reduction <add>, %49, %cst_28 [1] : vector<4x256xf32> to vector<4xf32>
      %51 = vector.shape_cast %50 : vector<4xf32> to vector<4x1xf32>
      %c0_29 = arith.constant 0 : index
      %c0_30 = arith.constant 0 : index
      %c0_31 = arith.constant 0 : index
      %52 = vector.load %arg4[%c0_29, %c0_30, %c0_31] : memref<1x4x4xf32, #tpu.memory_space<vmem>>, vector<1x4x1xf32>
      %53 = vector.shape_cast %52 : vector<1x4x1xf32> to vector<4x1xf32>
      %54 = vector.shape_cast %51 : vector<4x1xf32> to vector<1x4x1xf32>
      tpu.vector_store %arg4[%c0_29, %c0_30, %c0_31], %54 {strides = array<i32>} : memref<1x4x4xf32, #tpu.memory_space<vmem>>, vector<1x4x1xf32>,
      %c0_32 = arith.constant 0 : index
      %c0_33 = arith.constant 0 : index
      %55 = vector.load %arg6[%c0_32, %c0_33] : memref<4x256xf32, #tpu.memory_space<vmem>>, vector<4x256xf32>
      %cst_34 = arith.constant dense<0.000000e+00> : vector<4xf32>
      %56 = vector.multi_reduction <add>, %55, %cst_34 [1] : vector<4x256xf32> to vector<4xf32>
      %57 = vector.shape_cast %56 : vector<4xf32> to vector<4x1xf32>
      %c0_35 = arith.constant 0 : index
      %c0_36 = arith.constant 0 : index
      %c1 = arith.constant 1 : index
      %58 = vector.load %arg4[%c0_35, %c0_36, %c1] : memref<1x4x4xf32, #tpu.memory_space<vmem>>, vector<1x4x1xf32>
      %59 = vector.shape_cast %58 : vector<1x4x1xf32> to vector<4x1xf32>
      %60 = vector.shape_cast %57 : vector<4x1xf32> to vector<1x4x1xf32>
      tpu.vector_store %arg4[%c0_35, %c0_36, %c1], %60 {strides = array<i32>} : memref<1x4x4xf32, #tpu.memory_space<vmem>>, vector<1x4x1xf32>,
      %c0_37 = arith.constant 0 : index
      %c0_38 = arith.constant 0 : index
      %61 = vector.load %arg7[%c0_37, %c0_38] : memref<4x256xf32, #tpu.memory_space<vmem>>, vector<4x256xf32>
      %cst_39 = arith.constant dense<0.000000e+00> : vector<4xf32>
      %62 = vector.multi_reduction <add>, %61, %cst_39 [1] : vector<4x256xf32> to vector<4xf32>
      %63 = vector.shape_cast %62 : vector<4xf32> to vector<4x1xf32>
      %c0_40 = arith.constant 0 : index
      %c0_41 = arith.constant 0 : index
      %c2 = arith.constant 2 : index
      %64 = vector.load %arg4[%c0_40, %c0_41, %c2] : memref<1x4x4xf32, #tpu.memory_space<vmem>>, vector<1x4x1xf32>
      %65 = vector.shape_cast %64 : vector<1x4x1xf32> to vector<4x1xf32>
      %66 = vector.shape_cast %63 : vector<4x1xf32> to vector<1x4x1xf32>
      tpu.vector_store %arg4[%c0_40, %c0_41, %c2], %66 {strides = array<i32>} : memref<1x4x4xf32, #tpu.memory_space<vmem>>, vector<1x4x1xf32>,
      %c0_42 = arith.constant 0 : index
      %c0_43 = arith.constant 0 : index
      %67 = vector.load %arg8[%c0_42, %c0_43] : memref<4x256xf32, #tpu.memory_space<vmem>>, vector<4x256xf32>
      %cst_44 = arith.constant dense<0.000000e+00> : vector<4xf32>
      %68 = vector.multi_reduction <add>, %67, %cst_44 [1] : vector<4x256xf32> to vector<4xf32>
      %69 = vector.shape_cast %68 : vector<4xf32> to vector<4x1xf32>
      %c0_45 = arith.constant 0 : index
      %c0_46 = arith.constant 0 : index
      %c3 = arith.constant 3 : index
      %70 = vector.load %arg4[%c0_45, %c0_46, %c3] : memref<1x4x4xf32, #tpu.memory_space<vmem>>, vector<1x4x1xf32>
      %71 = vector.shape_cast %70 : vector<1x4x1xf32> to vector<4x1xf32>
      %72 = vector.shape_cast %69 : vector<4x1xf32> to vector<1x4x1xf32>
      tpu.vector_store %arg4[%c0_45, %c0_46, %c3], %72 {strides = array<i32>} : memref<1x4x4xf32, #tpu.memory_space<vmem>>, vector<1x4x1xf32>,
    } else {
    }
    return
  }
  func.func @transform_0(%arg0: i32, %arg1: i32) -> (i32, i32, i32) {
    %c0_i32 = arith.constant 0 : i32
    %c0_i32_0 = arith.constant 0 : i32
    return %arg0, %c0_i32, %arg1 : i32, i32, i32
  }
  func.func @transform_1(%arg0: i32, %arg1: i32) -> (i32, i32, i32) {
    %c0_i32 = arith.constant 0 : i32
    %c0_i32_0 = arith.constant 0 : i32
    return %arg0, %c0_i32, %arg1 : i32, i32, i32
  }
  func.func @transform_2(%arg0: i32, %arg1: i32) -> (i32, i32, i32) {
    %c0_i32 = arith.constant 0 : i32
    %c0_i32_0 = arith.constant 0 : i32
    %c0_i32_1 = arith.constant 0 : i32
    return %arg0, %c0_i32, %c0_i32_0 : i32, i32, i32
  }
}

</mosaic_0001>

<llo_original>
// kernel: tpu_custom_call.1
$region0: #{tpu_custom_call.1}
  #allocation0 [shape = 'u32[]', space=smem, size = 0x4, offset = 0x4, fixed_abs, tag = 'smem constant byte address 0x4 - core index']
  #allocation1 [shape = 'u32[144,128]{1,0:T(1,128)}', space=vmem, size = 0x12000, scoped, tag = 'internal scratch']
  #allocation2 [shape = 'f32[4,256]{1,0:T(4,128)}', space=vmem, size = 0x1000, scoped, tag = 'scratch operand']
  #allocation3 [shape = 'f32[4,256]{1,0:T(4,128)}', space=vmem, size = 0x1000, scoped, tag = 'scratch operand']
  #allocation4 [shape = 'f32[4,256]{1,0:T(4,128)}', space=vmem, size = 0x1000, scoped, tag = 'scratch operand']
  #allocation5 [shape = 'f32[4,256]{1,0:T(4,128)}', space=vmem, size = 0x1000, scoped, tag = 'scratch operand']
  %s0 = inlined_call_operand.hbm [shape: f32[2,4,256], index: 0, kind: input, shape index: {}]
  %s1 = inlined_call_operand.hbm [shape: s32[2,1,256], index: 1, kind: input, shape index: {}]
  %s2 = inlined_call_operand.hbm [shape: f32[2,4,4], index: 2, kind: output, shape index: {}]
  %s3 = sld [smem:[#allocation0]]
  $region57: #{tpu_custom_call.1} parent=0
    _
  %s5 = ssub.s32 1, %s3
  %s6 = scalar_select 0, %s5, %s3
  $region1: #{tpu_custom_call.1} parent=0
    #allocation6 [shape = 'u8[8192]{0}', space=vmem, size = 0x2000, scoped, tag = 'input window, operand 0']
    #allocation7 [shape = 's32[2]{0}', space=sflag, size = 0x8, scoped, tag = 'scoped memory for tpu_custom_call.1']
    #allocation8 [shape = 's32[2]{0}', space=sflag, size = 0x8, scoped, tag = 'scoped memory for tpu_custom_call.1']
    #allocation9 [shape = 'u8[2048]{0}', space=vmem, size = 0x800, scoped, tag = 'input window, operand 1']
    #allocation10 [shape = 's32[2]{0}', space=sflag, size = 0x8, scoped, tag = 'scoped memory for tpu_custom_call.1']
    #allocation11 [shape = 'u8[4096]{0}', space=vmem, size = 0x1000, scoped, tag = 'output window, operand 0']
    %7 = vsyncpa [#allocation7], 0
    %s8 = scalar_lea.sflag [#allocation7], 1
    %9 = vsyncpa %s8, 0
    %10 = vsyncpa [#allocation10], 0
    %s11 = scalar_lea.sflag [#allocation10], 1
    %12 = vsyncpa %s11, 0
    %13 = vsyncpa [#allocation8], 0
    %s14 = scalar_lea.sflag [#allocation8], 1
    %15 = vsyncpa %s14, 0
    loop: start=0, step=1, limit=4
    $region2: #{tpu_custom_call.1} parent=1 // loop_pre_header
      _
    $region3: #{tpu_custom_call.1} parent=1 // loop_header
      %s17 = sphi 0, %s21
      %p18 = scmp.ge.s32.totalorder %s17, 4
      %s24 = sphi 0, %s36
      %s25 = sphi 0, %s32
      %s26 = sphi 0, %s24
      %s27 = sphi 0, %s25
      %s28 = sphi 0, %s26
      %s29 = sphi 0, %s27
      %s41 = sphi 0, %s43
      %s44 = sphi 0, %s41
      %s45 = sphi 0, %s44
      %s61 = sphi 0, %s45
      %s69 = sphi 0, %s71
      %s72 = sphi 0, %s69
      %s73 = sphi 0, %s72
      %s89 = sphi 0, %s73
      %s95 = sphi 0, %s97
      %s98 = sphi 0, %s95
      %s99 = sphi 0, %s98
      %s115 = sphi 0, %s99
    $region4: #{tpu_custom_call.1} parent=1 // loop_header_branch
      %20 = sbr.rel (%p18) target = $region8
    $region5: #{tpu_custom_call.1} parent=1 // loop_body
      %s22 = ssub.s32 %s17, 1
      %s23 = ssub.s32 %s17, 2
      %s30 = sadd.s32 1, %s25
      %p31 = scmp.ge.s32.totalorder %s30, 1
      %s32 = scalar_select %p31, 0, %s30
      %s33 = sadd.s32 1, %s24
      %s34 = scalar_select %p31, %s33, %s24
      %p35 = scmp.ge.s32.totalorder %s34, 2
      %s36 = scalar_select %p35, 0, %s34
      %s37 = ssub.s32 %s24, %s36
      %s38 = ssub.s32 %s25, %s32
      %s39 = sor.u32 %s37, %s38
      %p40 = scmp.eq.s32.totalorder %s39, 0
      %s42 = sadd.s32 %s41, 1
      %s43 = scalar_select %p40, %s41, %s42
      %p46 = pneg %p40
      %p47 = scmp.eq.s32.totalorder %s17, 1
      %p48 = por %p46, %p47
      %p49 = scmp.ne.s32.totalorder %s41, %s44
      %p50 = scmp.eq.s32.totalorder %s17, 0
      %p51 = por %p49, %p50
      %p52 = scmp.ne.s32.totalorder %s41, %s44
      %p53 = scmp.eq.s32.totalorder %s22, 1
      %p54 = por %p52, %p53
      %p55 = scmp.ne.s32.totalorder %s44, %s45
      %p56 = scmp.eq.s32.totalorder %s22, 0
      %p57 = por %p55, %p56
      %p58 = scmp.ne.s32.totalorder %s44, %s45
      %p59 = scmp.eq.s32.totalorder %s23, 1
      %p60 = por %p58, %p59
      %p62 = scmp.ne.s32.totalorder %s45, %s61
      %p63 = scmp.eq.s32.totalorder %s23, 0
      %p64 = por %p62, %p63
      %s65 = ssub.s32 %s24, %s36
      %s66 = ssub.s32 %s25, %s32
      %s67 = sor.u32 %s65, %s66
      %p68 = scmp.eq.s32.totalorder %s67, 0
      %s70 = sadd.s32 %s69, 1
      %s71 = scalar_select %p68, %s69, %s70
      %p74 = pneg %p68
      %p75 = scmp.eq.s32.totalorder %s17, 1
      %p76 = por %p74, %p75
      %p77 = scmp.ne.s32.totalorder %s69, %s72
      %p78 = scmp.eq.s32.totalorder %s17, 0
      %p79 = por %p77, %p78
      %p80 = scmp.ne.s32.totalorder %s69, %s72
      %p81 = scmp.eq.s32.totalorder %s22, 1
      %p82 = por %p80, %p81
      %p83 = scmp.ne.s32.totalorder %s72, %s73
      %p84 = scmp.eq.s32.totalorder %s22, 0
      %p85 = por %p83, %p84
      %p86 = scmp.ne.s32.totalorder %s72, %s73
      %p87 = scmp.eq.s32.totalorder %s23, 1
      %p88 = por %p86, %p87
      %p90 = scmp.ne.s32.totalorder %s73, %s89
      %p91 = scmp.eq.s32.totalorder %s23, 0
      %p92 = por %p90, %p91
      %s93 = ssub.s32 %s24, %s36
      %p94 = scmp.eq.s32.totalorder %s93, 0
      %s96 = sadd.s32 %s95, 1
      %s97 = scalar_select %p94, %s95, %s96
      %p100 = pneg %p94
      %p101 = scmp.eq.s32.totalorder %s17, 1
      %p102 = por %p100, %p101
      %p103 = scmp.ne.s32.totalorder %s95, %s98
      %p104 = scmp.eq.s32.totalorder %s17, 0
      %p105 = por %p103, %p104
      %p106 = scmp.ne.s32.totalorder %s95, %s98
      %p107 = scmp.eq.s32.totalorder %s22, 1
      %p108 = por %p106, %p107
      %p109 = scmp.ne.s32.totalorder %s98, %s99
      %p110 = scmp.eq.s32.totalorder %s22, 0
      %p111 = por %p109, %p110
      %p112 = scmp.ne.s32.totalorder %s98, %s99
      %p113 = scmp.eq.s32.totalorder %s23, 1
      %p114 = por %p112, %p113
      %p116 = scmp.ne.s32.totalorder %s99, %s115
      %p117 = scmp.eq.s32.totalorder %s23, 0
      %p118 = por %p116, %p117
      %p119 = scmp.le.s32.totalorder 1, %s17
      %p120 = scmp.lt.s32.totalorder %s17, 3
      %p121 = pnand %p119, %p120
      %p122 = pneg %p121
      // Predicated region
      $region9: #{tpu_custom_call.1} parent=5 // pred_check
        _
      $region10: #{tpu_custom_call.1} parent=5 // pred_check_branch
        %124 = sbr.rel (%p121) target = $region12
      $region11: #{tpu_custom_call.1} parent=5 // pred_region
        %s125 = ssub.s32 %s17, 1
      $region12: #{tpu_custom_call.1} parent=5 // pred_fallthru
        _
      %p126 = scmp.lt.s32.totalorder %s17, 2
      // Predicated region
      $region13: #{tpu_custom_call.1} parent=5 // pred_check
        %p127 = pneg %p126
      $region14: #{tpu_custom_call.1} parent=5 // pred_check_branch
        %129 = sbr.rel (%p127) target = $region16
      $region15: #{tpu_custom_call.1} parent=5 // pred_region
        // Predicated region
        $region17: #{tpu_custom_call.1} parent=15 // pred_check
          %p130 = pneg %p51
        $region18: #{tpu_custom_call.1} parent=15 // pred_check_branch
          %132 = sbr.rel (%p130) target = $region20
        $region19: #{tpu_custom_call.1} parent=15 // pred_region
          %s133 = sand.u32 %s41, 1
          %s134 = scalar_lea.sflag [#allocation7], %s133
          %s135 = sand.u32 %s41, 1
          %s136 = smul.addr %s135, 8
          %s137 = scalar_lea.vmem [#allocation6], %s136
          %s138 = smul.u32 2, %s25
          %s140 = ssub.s32 128, 128
          %141 = vsyncadd %s134, %s140
          %s142 = smul.addr %s24, 2
          %s143 = sadd.s32 %s138, %s142
          %s144 = smul.addr %s143, 64
          %s145 = scalar_lea.hbm %s0, %s144
          %s147 = sshll.u32 %s137, 4
          %s148 = int_to_ptr.vmem [resolvable:$true] %s147
          %150 = dma.hbm_to_vmem [thread:$0]  %s145, 128, %s148, %s134
        $region20: #{tpu_custom_call.1} parent=15 // pred_fallthru
          _
        // Predicated region
        $region21: #{tpu_custom_call.1} parent=15 // pred_check
          %p151 = pneg %p79
        $region22: #{tpu_custom_call.1} parent=15 // pred_check_branch
          %153 = sbr.rel (%p151) target = $region24
        $region23: #{tpu_custom_call.1} parent=15 // pred_region
          %s154 = sand.u32 %s69, 1
          %s155 = scalar_lea.sflag [#allocation10], %s154
          %s156 = sand.u32 %s69, 1
          %s157 = smul.addr %s156, 2
          %s158 = scalar_lea.vmem [#allocation9], %s157
          %s159 = smul.u32 2, %s25
          %s161 = ssub.s32 32, 32
          %162 = vsyncadd %s155, %s161
          %s163 = smul.addr %s24, 2
          %s164 = sadd.s32 %s159, %s163
          %s165 = smul.addr %s164, 16
          %s166 = scalar_lea.hbm %s1, %s165
          %s168 = sshll.u32 %s158, 4
          %s169 = int_to_ptr.vmem [resolvable:$true] %s168
          %171 = dma.hbm_to_vmem [thread:$0]  %s166, 32, %s169, %s155
        $region24: #{tpu_custom_call.1} parent=15 // pred_fallthru
          _
      $region16: #{tpu_custom_call.1} parent=5 // pred_fallthru
        _
      %p172 = scmp.le.s32.totalorder 1, %s17
      %p173 = scmp.lt.s32.totalorder %s17, 3
      %p174 = pnand %p172, %p173
      %p175 = pneg %p174
      // Predicated region
      $region25: #{tpu_custom_call.1} parent=5 // pred_check
        _
      $region26: #{tpu_custom_call.1} parent=5 // pred_check_branch
        %177 = sbr.rel (%p174) target = $region28
      $region27: #{tpu_custom_call.1} parent=5 // pred_region
        %s178 = ssub.s32 %s17, 1
        %s179 = sand.u32 %s44, 1
        %s180 = scalar_lea.sflag [#allocation7], %s179
        %s181 = sand.u32 %s44, 1
        %s182 = smul.addr %s181, 8
        %s183 = scalar_lea.vmem [#allocation6], %s182
        // Predicated region
        $region29: #{tpu_custom_call.1} parent=27 // pred_check
          %p184 = pneg %p57
        $region30: #{tpu_custom_call.1} parent=27 // pred_check_branch
          %186 = sbr.rel (%p184) target = $region32
        $region31: #{tpu_custom_call.1} parent=27 // pred_region
          %187 = dma.done %s180, 128
        $region32: #{tpu_custom_call.1} parent=27 // pred_fallthru
          _
        %s188 = sand.u32 %s72, 1
        %s189 = scalar_lea.sflag [#allocation10], %s188
        %s190 = sand.u32 %s72, 1
        %s191 = smul.addr %s190, 2
        %s192 = scalar_lea.vmem [#allocation9], %s191
        // Predicated region
        $region33: #{tpu_custom_call.1} parent=27 // pred_check
          %p193 = pneg %p85
        $region34: #{tpu_custom_call.1} parent=27 // pred_check_branch
          %195 = sbr.rel (%p193) target = $region36
        $region35: #{tpu_custom_call.1} parent=27 // pred_region
          %196 = dma.done %s189, 32
        $region36: #{tpu_custom_call.1} parent=27 // pred_fallthru
          _
        %s197 = sand.u32 %s44, 1
        %s198 = scalar_lea.sflag [#allocation7], %s197
        %s199 = sand.u32 %s44, 1
        %s200 = smul.addr %s199, 8
        %s201 = scalar_lea.vmem [#allocation6], %s200
        %p202 = pneg %p57
        %p203 = pneg %p54
        %s204 = sand.u32 %s72, 1
        %s205 = scalar_lea.sflag [#allocation10], %s204
        %s206 = sand.u32 %s72, 1
        %s207 = smul.addr %s206, 2
        %s208 = scalar_lea.vmem [#allocation9], %s207
        %p209 = pneg %p85
        %p210 = pneg %p82
        %p211 = pneg %p111
        %p212 = pneg %p108
        %s213 = sand.u32 %s98, 1
        %s214 = scalar_lea.sflag [#allocation8], %s213
        %s215 = sand.u32 %s98, 1
        %s216 = smul.addr %s215, 4
        %s217 = scalar_lea.vmem [#allocation11], %s216
        %s218 = smul.u32 2, %s27
        %s219 = smul.u32 2, %s27
        %p220 = scmp.eq.s32.totalorder %s27, 0
        // Predicated region
        $region37: #{tpu_custom_call.1} parent=27 // pred_check
          %p221 = pneg %p220
        $region38: #{tpu_custom_call.1} parent=27 // pred_check_branch
          %223 = sbr.rel (%p221) target = $region40
        $region39: #{tpu_custom_call.1} parent=27 // pred_region
          %224 = vst [vmem:[#allocation2] sm:$0xff] 0.0
          %225 = vst [vmem:[#allocation3] sm:$0xff] 0.0
          %226 = vst [vmem:[#allocation4] sm:$0xff] 0.0
          %227 = vst [vmem:[#allocation5] sm:$0xff] 0.0
        $region40: #{tpu_custom_call.1} parent=27 // pred_fallthru
          _
        %v228 = vld [vmem:[%s183] sm:$0xff]
        %v229 = vld [vmem:[%s192] sm:$0x3]
        %vm230 = vcmp.ge.s32.totalorder %v229, 0
        %v231 = vsel %vm230, 1, 0
        %v232 = vcvt.s32.f32 %v231
        %v233 = vlaneseq
        %v234 = vshrl.u32 %v233, 7
        %v235 = vlaneseq
        %v236 = vshrl.u32 %v235, 7
        %v237 = vsub.s32 0, %v236
        %v238 = vrot.slane %v229, %v237
        %v239 = vlaneseq
        %v240 = vshrl.u32 %v239, 7
        %v241 = vsub.s32 1, %v240
        %v242 = vrot.slane %v229, %v241
        %vm243 = vcmp.eq.s32.totalorder %v234, %v238
        %vm244 = vcmp.eq.s32.totalorder %v234, %v242
        %v245 = vsel %vm243, 1, 0
        %v246 = vsel %vm244, 1, 0
        %v247 = vcvt.s32.f32 %v245
        %v248 = vcvt.s32.f32 %v246
        %v250 = vcombine.high %v228, %v228
        %vm252 = vcmask 1043456
        %v253 = vsel %vm252, %v228, -inf
        %v254 = vrot.slane %v253, 4
        %v255 = vmax.f32 %v253, %v254
        %v256 = vrot.slane %v255, 2
        %v257 = vmax.f32 %v255, %v256
        %v258 = vrot.slane %v257, 1
        %v259 = vmax.f32 %v257, %v258
        %v260 = vsel %vm252, %v250, -inf
        %v261 = vrot.slane %v260, 4
        %v262 = vmax.f32 %v260, %v261
        %v263 = vrot.slane %v262, 2
        %v264 = vmax.f32 %v262, %v263
        %v265 = vrot.slane %v264, 1
        %v266 = vmax.f32 %v264, %v265
        %v269 = vcombine.low %v259, %v266
        %v271 = vsub.f32 %v228, %v269
        %v272 = vmul.f32 %v271, 1.442695
        %v273 = vpow.pop %v272
        %v275 = vcombine.high %v273, %v273
        %v277 = vsel %vm252, %v273, 0.0
        %v278 = vrot.slane %v277, 4
        %v279 = vadd.f32 %v277, %v278
        %v280 = vrot.slane %v279, 2
        %v281 = vadd.f32 %v279, %v280
        %v282 = vrot.slane %v281, 1
        %v283 = vadd.f32 %v281, %v282
        %v284 = vsel %vm252, %v275, 0.0
        %v285 = vrot.slane %v284, 4
        %v286 = vadd.f32 %v284, %v285
        %v287 = vrot.slane %v286, 2
        %v288 = vadd.f32 %v286, %v287
        %v289 = vrot.slane %v288, 1
        %v290 = vadd.f32 %v288, %v289
        %v291 = vrcp.pop %v283
        %v292 = vrcp.pop %v290
        %v295 = vcombine.low %v291, %v292
        %v297 = vmul.f32 %v273, %v295
        %v298 = vlog2.pop %v283
        %v299 = vmul.f32 %v298, 0.6931472
        %v300 = vlog2.pop %v290
        %v301 = vmul.f32 %v300, 0.6931472
        %v302 = vadd.f32 %v299, %v259
        %v303 = vadd.f32 %v301, %v266
        %v304 = vld [vmem:[#allocation2] sm:$0xff]
        %v305 = vsub.f32 %v302, %v228
        %v306 = vsub.f32 %v303, %v250
        %v307 = vmul.f32 %v247, %v305
        %v308 = vmul.f32 %v248, %v306
        %v311 = vcombine.low %v307, %v308
        %v313 = vadd.f32 %v304, %v311
        %314 = vst [vmem:[#allocation2] sm:$0xff] %v313
        %v315 = vld [vmem:[#allocation3] sm:$0xff]
        %v318 = vcombine.low %v247, %v248
        %v320 = vmul.f32 %v297, %v318
        %v321 = vadd.f32 %v315, %v320
        %322 = vst [vmem:[#allocation3] sm:$0xff] %v321
        %v323 = vld [vmem:[#allocation4] sm:$0xff]
        %v325 = vlaneseq
        %v326 = vshrl.u32 %v325, 7
        %v327 = vsub.s32 0, %v326
        %v328 = vrot.slane %v232, %v327
        %v329 = vlaneseq
        %v330 = vshrl.u32 %v329, 7
        %v331 = vsub.s32 1, %v330
        %v332 = vrot.slane %v232, %v331
        %v333 = vcombine.low %v328, %v332
        %v335 = vmul.f32 %v297, %v333
        %v336 = vadd.f32 %v323, %v335
        %337 = vst [vmem:[#allocation4] sm:$0xff] %v336
        %v338 = vld [vmem:[#allocation5] sm:$0xff]
        %v339 = vadd.f32 %v338, %v318
        %340 = vst [vmem:[#allocation5] sm:$0xff] %v339
        // Predicated region
        $region41: #{tpu_custom_call.1} parent=27 // pred_check
          %p341 = pneg %p220
        $region42: #{tpu_custom_call.1} parent=27 // pred_check_branch
          %343 = sbr.rel (%p341) target = $region44
        $region43: #{tpu_custom_call.1} parent=27 // pred_region
          %v344 = vld [vmem:[#allocation2] sm:$0xff]
          %v346 = vcombine.high %v344, %v344
          %v348 = vsel %vm252, %v344, 0.0
          %v349 = vsel %vm252, %v346, 0.0
          %v350 = vadd.f32 %v348, %v349
          %351 = vadd.xlane.f32.xlu0 %v350
          %v352 = vpop.xlane.xlu0 %351
          %vm353 = vcmask 3072
          %354 = vst.msk [vmem:[%s217] sm:$0xf] %vm353, %v352
          %v355 = vld [vmem:[#allocation3] sm:$0xff]
          %v357 = vcombine.high %v355, %v355
          %v359 = vsel %vm252, %v355, 0.0
          %v360 = vsel %vm252, %v357, 0.0
          %v361 = vadd.f32 %v359, %v360
          %362 = vadd.xlane.f32.xlu0 %v361
          %v363 = vpop.xlane.xlu0 %362
          %vm364 = vcmask 11272
          %365 = vst.msk [vmem:[%s217] sm:$0xf] %vm364, %v363
          %v366 = vld [vmem:[#allocation4] sm:$0xff]
          %v368 = vcombine.high %v366, %v366
          %v370 = vsel %vm252, %v366, 0.0
          %v371 = vsel %vm252, %v368, 0.0
          %v372 = vadd.f32 %v370, %v371
          %373 = vadd.xlane.f32.xlu0 %v372
          %v374 = vpop.xlane.xlu0 %373
          %vm375 = vcmask 19472
          %376 = vst.msk [vmem:[%s217] sm:$0xf] %vm375, %v374
          %v377 = vld [vmem:[#allocation5] sm:$0xff]
          %v379 = vcombine.high %v377, %v377
          %v381 = vsel %vm252, %v377, 0.0
          %v382 = vsel %vm252, %v379, 0.0
          %v383 = vadd.f32 %v381, %v382
          %384 = vadd.xlane.f32.xlu0 %v383
          %v385 = vpop.xlane.xlu0 %384
          %vm386 = vcmask 27672
          %387 = vst.msk [vmem:[%s217] sm:$0xf] %vm386, %v385
        $region44: #{tpu_custom_call.1} parent=27 // pred_fallthru
          _
        %s388 = sand.u32 %s98, 1
        %s389 = scalar_lea.sflag [#allocation8], %s388
        %s390 = sand.u32 %s98, 1
        %s391 = smul.addr %s390, 4
        %s392 = scalar_lea.vmem [#allocation11], %s391
        // Predicated region
        $region45: #{tpu_custom_call.1} parent=27 // pred_check
          %p393 = pneg %p108
        $region46: #{tpu_custom_call.1} parent=27 // pred_check_branch
          %395 = sbr.rel (%p393) target = $region48
        $region47: #{tpu_custom_call.1} parent=27 // pred_region
          %s397 = ssub.s32 64, 64
          %398 = vsyncadd %s389, %s397
          %s399 = smul.addr %s26, 64
          %s400 = scalar_lea.hbm %s2, %s399
          %s402 = sshll.u32 %s392, 4
          %s403 = int_to_ptr.vmem [resolvable:$true] %s402
          %405 = dma.vmem_to_hbm [thread:$0]  %s403, 64, %s400, %s389
        $region48: #{tpu_custom_call.1} parent=27 // pred_fallthru
          _
      $region28: #{tpu_custom_call.1} parent=5 // pred_fallthru
        _
      %p406 = scmp.le.s32.totalorder 2, %s17
      // Predicated region
      $region49: #{tpu_custom_call.1} parent=5 // pred_check
        %p407 = pneg %p406
      $region50: #{tpu_custom_call.1} parent=5 // pred_check_branch
        %409 = sbr.rel (%p407) target = $region52
      $region51: #{tpu_custom_call.1} parent=5 // pred_region
        %s410 = ssub.s32 %s17, 2
        // Predicated region
        $region53: #{tpu_custom_call.1} parent=51 // pred_check
          %p411 = pneg %p114
        $region54: #{tpu_custom_call.1} parent=51 // pred_check_branch
          %413 = sbr.rel (%p411) target = $region56
        $region55: #{tpu_custom_call.1} parent=51 // pred_region
          %s414 = sand.u32 %s99, 1
          %s415 = scalar_lea.sflag [#allocation8], %s414
          %s416 = sand.u32 %s99, 1
          %s417 = smul.addr %s416, 4
          %s418 = scalar_lea.vmem [#allocation11], %s417
          %419 = dma.done %s415, 64
        $region56: #{tpu_custom_call.1} parent=51 // pred_fallthru
          _
      $region52: #{tpu_custom_call.1} parent=5 // pred_fallthru
        _
    $region6: #{tpu_custom_call.1} parent=1 // loop_footer
      %s21 = sadd.s32 1, %s17
    $region7: #{tpu_custom_call.1} parent=1 // loop_footer_branch
      %16 = sbr.rel target = $region3
    $region8: #{tpu_custom_call.1} parent=1 // loop_exit
      _
    %420 = vsyncpa [#allocation7], 1
    %s421 = scalar_lea.sflag [#allocation7], 1
    %422 = vsyncpa %s421, 1
    %423 = vsyncpa [#allocation10], 1
    %s424 = scalar_lea.sflag [#allocation10], 1
    %425 = vsyncpa %s424, 1
    %426 = vsyncpa [#allocation8], 1
    %s427 = scalar_lea.sflag [#allocation8], 1
    %428 = vsyncpa %s427, 1

</llo_original>
